<compile_context>
chip_gen: v7x
topology: tpu7x:2x2x1
jax: 0.10.0
libtpu: 0.0.40
codegen_flags: <defaults>
</compile_context>

<pallas_src>
import functools

import jax
import jax.numpy as jnp
from jax.experimental import pallas as pl
from jax.experimental.pallas import tpu as pltpu


# -----------------------------------------------------------------------------
# Shared numerics (used identically by kernel and reference).
# -----------------------------------------------------------------------------
def _sigmoid(h):
    # Numerically stable logistic: exp only ever sees a non-positive argument.
    e = jnp.exp(-jnp.abs(h))
    return jnp.where(h >= 0.0, 1.0, e) / (1.0 + e)


def _relu(h):
    return jnp.maximum(h, 0.0)


def _round_up(v, m):
    return (v + m - 1) // m * m


# -----------------------------------------------------------------------------
# Parameter-slab layout: four (LANE, LANE) lane/sublane-dense weight tiles plus
# one aligned (8, LANE) bias/BN block.  LANE = 128 for all widths <= 128.
# -----------------------------------------------------------------------------
def _build_layout(back_bone_sizes, unmixer_sizes, dna_finder_sizes):
    assert len(back_bone_sizes) == 3 and len(unmixer_sizes) == 3 \
        and len(dna_finder_sizes) == 3, "kernel specialized to 2 Linear layers/branch"
    IN, H1, H2 = back_bone_sizes
    assert unmixer_sizes[0] == H2 and dna_finder_sizes[0] == H2
    UH, UO = unmixer_sizes[1], unmixer_sizes[2]
    DH, DO = dna_finder_sizes[1], dna_finder_sizes[2]

    LANE = _round_up(max(IN, H1, H2, UH + DH, UO + DO), 128)
    layout = {
        "bb_w0":   0 * LANE,   # backbone linear 0              (IN -> H1)
        "bb_w1":   1 * LANE,   # backbone linear 1              (H1 -> H2)
        "head0_w": 2 * LANE,   # fused [unmixer.l0 | dna.l0]    (H2 -> UH+DH)
        "out_w":   3 * LANE,   # block-diag [um.l1 ; dna.l1]    (UH+DH -> UO+DO)
        "bias":    4 * LANE,   # 8 rows: bb_b0, bb_b1, head0_b, bn_g, bn_b, out_b, 0, 0
    }
    ROWS = 4 * LANE + 8
    dims = dict(IN=IN, H1=H1, H2=H2, UH=UH, UO=UO, DH=DH, DO=DO,
                LANE=LANE, ROWS=ROWS)
    return layout, dims


def pack_params(params, layout, dims):
    """Pack all weights/biases/BN params into one lane-dense f32 slab."""
    LANE, ROWS = dims["LANE"], dims["ROWS"]
    UH, UO, DO = dims["UH"], dims["UO"], dims["DO"]
    slab = jnp.zeros((ROWS, LANE), jnp.float32)

    def put(s, r0, c0, mat):
        mat = jnp.asarray(mat, jnp.float32)
        if mat.ndim == 1:
            mat = mat[None, :]
        return s.at[r0:r0 + mat.shape[0], c0:c0 + mat.shape[1]].set(mat)

    # Weight tiles (zero padding outside the real (in, out) extents).
    slab = put(slab, layout["bb_w0"], 0, params["bb_w0"])
    slab = put(slab, layout["bb_w1"], 0, params["bb_w1"])
    slab = put(slab, layout["head0_w"], 0, params["um_w0"])     # lanes [0, UH)
    slab = put(slab, layout["head0_w"], UH, params["df_w0"])    # lanes [UH, UH+DH)
    r = layout["out_w"]                                         # block-diagonal
    slab = put(slab, r, 0, params["um_w1"])                     # rows [0,UH) x cols [0,UO)
    slab = put(slab, r + UH, UO, params["df_w1"])               # rows [UH,UH+DH) x cols [UO,UO+DO)
    # Bias / BN block (8 aligned rows).
    b0 = layout["bias"]
    slab = put(slab, b0 + 0, 0, params["bb_b0"])
    slab = put(slab, b0 + 1, 0, params["bb_b1"])
    slab = put(slab, b0 + 2, 0, params["um_b0"])
    slab = put(slab, b0 + 2, UH, params["df_b0"])
    # BN gamma/beta at lane offset UH; gamma=1 / beta=0 elsewhere so the
    # lane-masked BN is a no-op on non-dna lanes.
    slab = slab.at[b0 + 3, :].set(1.0)
    slab = put(slab, b0 + 3, UH, params["bn_g"])
    slab = put(slab, b0 + 4, UH, params["bn_b"])
    slab = put(slab, b0 + 5, 0, params["um_b1"])
    slab = put(slab, b0 + 5, UO, params["df_b1"])
    return slab


# -----------------------------------------------------------------------------
# Kernels + wrapper factory.
# -----------------------------------------------------------------------------
def make_combined_net(back_bone_sizes, unmixer_sizes, dna_finder_sizes,
                      *, batch_tile=1024, gridless_max_batch=1024):
    layout, dims = _build_layout(back_bone_sizes, unmixer_sizes, dna_finder_sizes)
    IN, UH, UO, DO = dims["IN"], dims["UH"], dims["UO"], dims["DO"]
    LANE, ROWS = dims["LANE"], dims["ROWS"]
    f32 = jnp.float32
    BN_EPS = 1e-5

    # ---- in-kernel helpers ---------------------------------------------------
    def _wtile(p_ref, name):
        # Full (LANE, LANE) lane/sublane-dense weight tile -> one clean MXU pass.
        return p_ref[pl.ds(layout[name], LANE), :]

    def _biases(p_ref):
        # One aligned (8, LANE) load for all bias / BN rows; rows indexed
        # in-register below (no single-sublane loads at odd offsets).
        return p_ref[pl.ds(layout["bias"], 8), :]

    def _backbone_head(x, p_ref, b):
        h = _relu(jnp.dot(x, _wtile(p_ref, "bb_w0"),
                          preferred_element_type=f32) + b[0:1])
        h = _relu(jnp.dot(h, _wtile(p_ref, "bb_w1"),
                          preferred_element_type=f32) + b[1:2])
        # Fused head first layers: lanes [0,UH) = unmixer hidden,
        # lanes [UH,UH+DH) = dna hidden, remaining lanes are exactly zero.
        return _relu(jnp.dot(h, _wtile(p_ref, "head0_w"),
                             preferred_element_type=f32) + b[2:3])

    def _bn_out(hd, mean, var, p_ref, b):
        # Lane-masked BatchNorm: applied only to dna lanes (>= UH); pure VPU
        # select, no lane slice / concat relayouts.
        lane = jax.lax.broadcasted_iota(jnp.int32, hd.shape, 1)
        bn = (hd - mean) * jax.lax.rsqrt(var + BN_EPS) * b[3:4] + b[4:5]
        ud = jnp.where(lane >= UH, bn, hd)
        o = jnp.dot(ud, _wtile(p_ref, "out_w"),
                    preferred_element_type=f32) + b[5:6]
        return _sigmoid(o)

    # ---- single-invocation kernel (small batch): BN stats in-kernel ----------
    def fused_kernel(x_ref, p_ref, out_ref, *, b_true):
        b = _biases(p_ref)
        hd = _backbone_head(x_ref[...], p_ref, b)
        # Row mask keeps padded batch rows (B -> multiple of 8) out of the
        # BatchNorm batch statistics.
        row = jax.lax.broadcasted_iota(jnp.int32, hd.shape, 0)
        rmask = row < b_true
        mean = jnp.sum(jnp.where(rmask, hd, 0.0), axis=0, keepdims=True) / b_true
        cent = jnp.where(rmask, hd - mean, 0.0)
        var = jnp.sum(cent * cent, axis=0, keepdims=True) / b_true
        out_ref[...] = _bn_out(hd, mean, var, p_ref, b).astype(out_ref.dtype)

    # ---- batch-tiled pass 1: backbone + fused head first layer -> hd slab ----
    def stage1_kernel(x_ref, p_ref, hd_ref):
        b = _biases(p_ref)
        hd_ref[...] = _backbone_head(x_ref[...], p_ref, b).astype(hd_ref.dtype)

    # ---- batch-tiled pass 2: BN with precomputed stats + output layers -------
    def stage2_kernel(hd_ref, p_ref, stats_ref, out_ref):
        b = _biases(p_ref)
        mean = stats_ref[0:1, :]
        var = stats_ref[1:2, :]
        out_ref[...] = _bn_out(hd_ref[...], mean, var, p_ref, b).astype(out_ref.dtype)

    vmem_spec = pl.BlockSpec(memory_space=pltpu.MemorySpace.VMEM)

    @jax.jit
    def forward(x, param_slab):
        B = x.shape[0]
        if B <= gridless_max_batch:
            # Small batch: launch/DMA-bound -> single gridless invocation.
            B8 = _round_up(B, 8)
            xp = jnp.zeros((B8, LANE), f32).at[:B, :IN].set(x.astype(f32))
            out = pl.pallas_call(
                functools.partial(fused_kernel, b_true=B),
                out_shape=jax.ShapeDtypeStruct((B8, LANE), f32),
                in_specs=[vmem_spec, vmem_spec],
                out_specs=vmem_spec,
                cost_estimate=pl.CostEstimate(
                    flops=2 * B8 * LANE * LANE * 4,
                    transcendentals=B8 * LANE,
                    bytes_accessed=4 * (2 * B8 * LANE + ROWS * LANE)),
            )(xp, param_slab)
        else:
            # Large batch: two-pass batch-tiled grid, "parallel" semantics
            # (both TensorCores on v7x), parameter slab resident via a
            # constant index_map.  BN batch stats are computed OUTSIDE the
            # kernels over the true batch rows -- mandatory correctness with
            # a batch grid (per-tile stats would silently diverge).
            TB = batch_tile
            Bp = _round_up(B, TB)
            nt = Bp // TB
            xp = jnp.zeros((Bp, LANE), f32).at[:B, :IN].set(x.astype(f32))
            parallel = pltpu.CompilerParams(dimension_semantics=("parallel",))
            hd = pl.pallas_call(
                stage1_kernel,
                out_shape=jax.ShapeDtypeStruct((Bp, LANE), f32),
                grid=(nt,),
                in_specs=[pl.BlockSpec((TB, LANE), lambda i: (i, 0)),
                          pl.BlockSpec((ROWS, LANE), lambda i: (0, 0))],
                out_specs=pl.BlockSpec((TB, LANE), lambda i: (i, 0)),
                compiler_params=parallel,
                cost_estimate=pl.CostEstimate(
                    flops=2 * Bp * LANE * LANE * 3,
                    transcendentals=0,
                    bytes_accessed=4 * (2 * Bp * LANE + ROWS * LANE)),
            )(xp, param_slab)
            d = hd[:B]                                  # true batch rows only
            mean = jnp.mean(d, axis=0)
            var = jnp.mean((d - mean) ** 2, axis=0)
            stats = jnp.zeros((8, LANE), f32).at[0].set(mean).at[1].set(var)
            out = pl.pallas_call(
                stage2_kernel,
                out_shape=jax.ShapeDtypeStruct((Bp, LANE), f32),
                grid=(nt,),
                in_specs=[pl.BlockSpec((TB, LANE), lambda i: (i, 0)),
                          pl.BlockSpec((ROWS, LANE), lambda i: (0, 0)),
                          pl.BlockSpec((8, LANE), lambda i: (0, 0))],
                out_specs=pl.BlockSpec((TB, LANE), lambda i: (i, 0)),
                compiler_params=parallel,
                cost_estimate=pl.CostEstimate(
                    flops=2 * Bp * LANE * LANE,
                    transcendentals=Bp * LANE,
                    bytes_accessed=4 * (2 * Bp * LANE + ROWS * LANE + 8 * LANE)),
            )(hd, param_slab, stats)
        unmix = out[:B, :UO]
        dna = out[:B, UO:UO + DO]
        return dna, unmix

    return forward, layout, dims


# -----------------------------------------------------------------------------
# Parameter init (PyTorch-style) — weights stored pre-transposed as (in, out).
# -----------------------------------------------------------------------------
def make_params(key, back_bone_sizes, unmixer_sizes, dna_finder_sizes):
    params = {}

    def linear_init(k, fan_in, fan_out):
        kw, kb = jax.random.split(k)
        bound = 1.0 / jnp.sqrt(float(fan_in))
        w = jax.random.uniform(kw, (fan_in, fan_out), jnp.float32, -bound, bound)
        b = jax.random.uniform(kb, (1, fan_out), jnp.float32, -bound, bound)
        return w, b

    keys = jax.random.split(key, 6)
    params["bb_w0"], params["bb_b0"] = linear_init(
        keys[0], back_bone_sizes[0], back_bone_sizes[1])
    params["bb_w1"], params["bb_b1"] = linear_init(
        keys[1], back_bone_sizes[1], back_bone_sizes[2])
    params["um_w0"], params["um_b0"] = linear_init(
        keys[2], unmixer_sizes[0], unmixer_sizes[1])
    params["um_w1"], params["um_b1"] = linear_init(
        keys[3], unmixer_sizes[1], unmixer_sizes[2])
    params["df_w0"], params["df_b0"] = linear_init(
        keys[4], dna_finder_sizes[0], dna_finder_sizes[1])
    params["bn_g"] = jnp.ones((1, dna_finder_sizes[1]), jnp.float32)
    params["bn_b"] = jnp.zeros((1, dna_finder_sizes[1]), jnp.float32)
    params["df_w1"], params["df_b1"] = linear_init(
        keys[5], dna_finder_sizes[1], dna_finder_sizes[2])
    return params


# -----------------------------------------------------------------------------
# Pure-JAX reference (uses the unpacked params, independent of the slab pack).
# -----------------------------------------------------------------------------
def reference_forward(x, p):
    dot = functools.partial(jnp.dot, precision=jax.lax.Precision.HIGHEST)
    h = _relu(dot(x, p["bb_w0"]) + p["bb_b0"])
    h = _relu(dot(h, p["bb_w1"]) + p["bb_b1"])
    u = _relu(dot(h, p["um_w0"]) + p["um_b0"])
    u = _sigmoid(dot(u, p["um_w1"]) + p["um_b1"])
    d = _relu(dot(h, p["df_w0"]) + p["df_b0"])
    mean = jnp.mean(d, axis=0, keepdims=True)
    var = jnp.mean((d - mean) ** 2, axis=0, keepdims=True)
    d = (d - mean) * jax.lax.rsqrt(var + 1e-5) * p["bn_g"] + p["bn_b"]
    d = _sigmoid(dot(d, p["df_w1"]) + p["df_b1"])
    return d, u


if __name__ == "__main__":
    back_bone_sizes = [16, 32, 32]
    unmixer_sizes = [32, 32, 8]
    dna_finder_sizes = [32, 32, 4]

    key = jax.random.PRNGKey(0)
    kp, kx1, kx2, kx3 = jax.random.split(key, 4)
    params = make_params(kp, back_bone_sizes, unmixer_sizes, dna_finder_sizes)

    # Small batch_tile / gridless_max_batch here purely so the demo exercises
    # BOTH code paths; production defaults are batch_tile=1024 (v5e-safe),
    # gridless_max_batch=1024.
    forward, layout, dims = make_combined_net(
        back_bone_sizes, unmixer_sizes, dna_finder_sizes,
        batch_tile=256, gridless_max_batch=64)
    param_slab = pack_params(params, layout, dims)

    def check(x, tol):
        dna, unmix = forward(x, param_slab)
        jax.block_until_ready((dna, unmix))
        dna_ref, unmix_ref = reference_forward(x, params)
        assert dna.shape == dna_ref.shape and unmix.shape == unmix_ref.shape
        assert jnp.allclose(dna, dna_ref, atol=tol, rtol=tol)
        assert jnp.allclose(unmix, unmix_ref, atol=tol, rtol=tol)

    # 1) Small batch -> single fused gridless kernel (BN stats in-kernel).
    check(jax.random.normal(kx1, (8, back_bone_sizes[0]), jnp.float32), 1e-5)
    # 2) Batch not a multiple of 8 -> exercises sublane padding + row-masked stats.
    check(jax.random.normal(kx2, (6, back_bone_sizes[0]), jnp.float32), 1e-5)
    # 3) Larger batch -> two-pass batch-tiled ("parallel",) grid path with BN
    #    stats precomputed outside the kernels.  Slightly looser tolerance for
    #    the batch-sized f32 reductions + MXU f32 matmuls vs HIGHEST-precision XLA.
    check(jax.random.normal(kx3, (512, back_bone_sizes[0]), jnp.float32), 5e-5)

    print("KERNEL_OK")
</pallas_src>

<mosaic_0001>
module attributes {stable_mosaic.version = 11 : i64} {
  func.func @fused_kernel(%arg0: memref<8x128xf32, #tpu.memory_space<vmem>>, %arg1: memref<520x128xf32, #tpu.memory_space<vmem>>, %arg2: memref<8x128xf32, #tpu.memory_space<vmem>>) attributes {dimension_semantics = [], scalar_prefetch = 0 : i64, scratch_operands = 0 : i64, tpu.core_type = #tpu.core_type<tc>} {
    %c512 = arith.constant 512 : index
    %c0 = arith.constant 0 : index
    %0 = vector.load %arg1[%c512, %c0] : memref<520x128xf32, #tpu.memory_space<vmem>>, vector<8x128xf32>
    %c0_0 = arith.constant 0 : index
    %c0_1 = arith.constant 0 : index
    %1 = vector.load %arg0[%c0_0, %c0_1] : memref<8x128xf32, #tpu.memory_space<vmem>>, vector<8x128xf32>
    %c0_2 = arith.constant 0 : index
    %c0_3 = arith.constant 0 : index
    %2 = vector.load %arg1[%c0_2, %c0_3] : memref<520x128xf32, #tpu.memory_space<vmem>>, vector<128x128xf32>
    %cst = arith.constant dense<0.000000e+00> : vector<8x128xf32>
    %3 = tpu.matmul %1, %2, %cst {dimension_numbers = #tpu.dot_dimension_numbers<[1], [0], [0], [1], [0, 0, 1, 1], [], []>} : vector<8x128xf32>, vector<128x128xf32>, vector<8x128xf32> -> vector<8x128xf32>
    %4 = vector.extract_strided_slice %0 {offsets = [0, 0], sizes = [1, 128], strides = [1, 1]} : vector<8x128xf32> to vector<1x128xf32>
    %5 = vector.broadcast %4 : vector<1x128xf32> to vector<8x128xf32>
    %6 = arith.addf %3, %5 : vector<8x128xf32>
    %cst_4 = arith.constant 0.000000e+00 : f32
    %7 = vector.broadcast %cst_4 : f32 to vector<8x128xf32>
    %8 = arith.maximumf %6, %7 : vector<8x128xf32>
    %c128 = arith.constant 128 : index
    %c0_5 = arith.constant 0 : index
    %9 = vector.load %arg1[%c128, %c0_5] : memref<520x128xf32, #tpu.memory_space<vmem>>, vector<128x128xf32>
    %cst_6 = arith.constant dense<0.000000e+00> : vector<8x128xf32>
    %10 = tpu.matmul %8, %9, %cst_6 {dimension_numbers = #tpu.dot_dimension_numbers<[1], [0], [0], [1], [0, 0, 1, 1], [], []>} : vector<8x128xf32>, vector<128x128xf32>, vector<8x128xf32> -> vector<8x128xf32>
    %11 = vector.extract_strided_slice %0 {offsets = [1, 0], sizes = [1, 128], strides = [1, 1]} : vector<8x128xf32> to vector<1x128xf32>
    %12 = vector.broadcast %11 : vector<1x128xf32> to vector<8x128xf32>
    %13 = arith.addf %10, %12 : vector<8x128xf32>
    %cst_7 = arith.constant 0.000000e+00 : f32
    %14 = vector.broadcast %cst_7 : f32 to vector<8x128xf32>
    %15 = arith.maximumf %13, %14 : vector<8x128xf32>
    %c256 = arith.constant 256 : index
    %c0_8 = arith.constant 0 : index
    %16 = vector.load %arg1[%c256, %c0_8] : memref<520x128xf32, #tpu.memory_space<vmem>>, vector<128x128xf32>
    %cst_9 = arith.constant dense<0.000000e+00> : vector<8x128xf32>
    %17 = tpu.matmul %15, %16, %cst_9 {dimension_numbers = #tpu.dot_dimension_numbers<[1], [0], [0], [1], [0, 0, 1, 1], [], []>} : vector<8x128xf32>, vector<128x128xf32>, vector<8x128xf32> -> vector<8x128xf32>
    %18 = vector.extract_strided_slice %0 {offsets = [2, 0], sizes = [1, 128], strides = [1, 1]} : vector<8x128xf32> to vector<1x128xf32>
    %19 = vector.broadcast %18 : vector<1x128xf32> to vector<8x128xf32>
    %20 = arith.addf %17, %19 : vector<8x128xf32>
    %cst_10 = arith.constant 0.000000e+00 : f32
    %21 = vector.broadcast %cst_10 : f32 to vector<8x128xf32>
    %22 = arith.maximumf %20, %21 : vector<8x128xf32>
    %23 = tpu.iota {dimensions = array<i32: 0>} : vector<8x128xi32>
    %c8_i32 = arith.constant 8 : i32
    %24 = vector.broadcast %c8_i32 : i32 to vector<8x128xi32>
    %25 = arith.cmpi slt, %23, %24 : vector<8x128xi32>
    %cst_11 = arith.constant 0.000000e+00 : f32
    %26 = vector.broadcast %cst_11 : f32 to vector<8x128xf32>
    %27 = arith.select %25, %22, %26 : vector<8x128xi1>, vector<8x128xf32>
    %cst_12 = arith.constant dense<0.000000e+00> : vector<128xf32>
    %28 = vector.multi_reduction <add>, %27, %cst_12 [0] : vector<8x128xf32> to vector<128xf32>
    %29 = vector.shape_cast %28 : vector<128xf32> to vector<1x128xf32>
    %cst_13 = arith.constant 8.000000e+00 : f32
    %30 = vector.broadcast %cst_13 : f32 to vector<1x128xf32>
    %31 = arith.divf %29, %30 : vector<1x128xf32>
    %32 = vector.broadcast %31 : vector<1x128xf32> to vector<8x128xf32>
    %33 = arith.subf %22, %32 : vector<8x128xf32>
    %cst_14 = arith.constant 0.000000e+00 : f32
    %34 = vector.broadcast %cst_14 : f32 to vector<8x128xf32>
    %35 = arith.select %25, %33, %34 : vector<8x128xi1>, vector<8x128xf32>
    %36 = arith.mulf %35, %35 : vector<8x128xf32>
    %cst_15 = arith.constant dense<0.000000e+00> : vector<128xf32>
    %37 = vector.multi_reduction <add>, %36, %cst_15 [0] : vector<8x128xf32> to vector<128xf32>
    %38 = vector.shape_cast %37 : vector<128xf32> to vector<1x128xf32>
    %cst_16 = arith.constant 8.000000e+00 : f32
    %39 = vector.broadcast %cst_16 : f32 to vector<1x128xf32>
    %40 = arith.divf %38, %39 : vector<1x128xf32>
    %41 = tpu.iota {dimensions = array<i32: 1>} : vector<8x128xi32>
    %42 = vector.broadcast %31 : vector<1x128xf32> to vector<8x128xf32>
    %43 = arith.subf %22, %42 : vector<8x128xf32>
    %cst_17 = arith.constant 9.99999974E-6 : f32
    %44 = vector.broadcast %cst_17 : f32 to vector<1x128xf32>
    %45 = arith.addf %40, %44 : vector<1x128xf32>
    %46 = math.rsqrt %45 : vector<1x128xf32>
    %47 = vector.broadcast %46 : vector<1x128xf32> to vector<8x128xf32>
    %48 = arith.mulf %43, %47 : vector<8x128xf32>
    %49 = vector.extract_strided_slice %0 {offsets = [3, 0], sizes = [1, 128], strides = [1, 1]} : vector<8x128xf32> to vector<1x128xf32>
    %50 = vector.broadcast %49 : vector<1x128xf32> to vector<8x128xf32>
    %51 = arith.mulf %48, %50 : vector<8x128xf32>
    %52 = vector.extract_strided_slice %0 {offsets = [4, 0], sizes = [1, 128], strides = [1, 1]} : vector<8x128xf32> to vector<1x128xf32>
    %53 = vector.broadcast %52 : vector<1x128xf32> to vector<8x128xf32>
    %54 = arith.addf %51, %53 : vector<8x128xf32>
    %c32_i32 = arith.constant 32 : i32
    %55 = vector.broadcast %c32_i32 : i32 to vector<8x128xi32>
    %56 = arith.cmpi sge, %41, %55 : vector<8x128xi32>
    %57 = arith.select %56, %54, %22 : vector<8x128xi1>, vector<8x128xf32>
    %c384 = arith.constant 384 : index
    %c0_18 = arith.constant 0 : index
    %58 = vector.load %arg1[%c384, %c0_18] : memref<520x128xf32, #tpu.memory_space<vmem>>, vector<128x128xf32>
    %cst_19 = arith.constant dense<0.000000e+00> : vector<8x128xf32>
    %59 = tpu.matmul %57, %58, %cst_19 {dimension_numbers = #tpu.dot_dimension_numbers<[1], [0], [0], [1], [0, 0, 1, 1], [], []>} : vector<8x128xf32>, vector<128x128xf32>, vector<8x128xf32> -> vector<8x128xf32>
    %60 = vector.extract_strided_slice %0 {offsets = [5, 0], sizes = [1, 128], strides = [1, 1]} : vector<8x128xf32> to vector<1x128xf32>
    %61 = vector.broadcast %60 : vector<1x128xf32> to vector<8x128xf32>
    %62 = arith.addf %59, %61 : vector<8x128xf32>
    %63 = math.absf %62 : vector<8x128xf32>
    %cst_20 = arith.constant 0.000000e+00 : f32
    %64 = vector.broadcast %cst_20 : f32 to vector<8x128xf32>
    %65 = arith.subf %64, %63 : vector<8x128xf32>
    %66 = math.exp %65 : vector<8x128xf32>
    %cst_21 = arith.constant 0.000000e+00 : f32
    %67 = vector.broadcast %cst_21 : f32 to vector<8x128xf32>
    %68 = arith.cmpf oge, %62, %67 : vector<8x128xf32>
    %cst_22 = arith.constant 1.000000e+00 : f32
    %69 = vector.broadcast %cst_22 : f32 to vector<8x128xf32>
    %70 = arith.select %68, %69, %66 : vector<8x128xi1>, vector<8x128xf32>
    %cst_23 = arith.constant 1.000000e+00 : f32
    %71 = vector.broadcast %cst_23 : f32 to vector<8x128xf32>
    %72 = arith.addf %71, %66 : vector<8x128xf32>
    %73 = arith.divf %70, %72 : vector<8x128xf32>
    %c0_24 = arith.constant 0 : index
    %c0_25 = arith.constant 0 : index
    %74 = vector.load %arg2[%c0_24, %c0_25] : memref<8x128xf32, #tpu.memory_space<vmem>>, vector<8x128xf32>
    tpu.vector_store %arg2[%c0_24, %c0_25], %73 {strides = array<i32>} : memref<8x128xf32, #tpu.memory_space<vmem>>, vector<8x128xf32>,
    return
  }
}

</mosaic_0001>

<llo_original>
// kernel: forward.1
$region0: #{forward.1}
  #allocation0 [shape = 'u32[]', space=smem, size = 0x4, offset = 0x4, fixed_abs, tag = 'smem constant byte address 0x4 - core index']
  #allocation1 [shape = 'u32[144,128]{1,0:T(1,128)}', space=vmem, size = 0x12000, scoped, tag = 'internal scratch']
  %s0 = inlined_call_operand.vmem [shape: f32[8,128], index: 0, kind: input, shape index: {}]
  %s1 = inlined_call_operand.hbm [shape: f32[520,128], index: 1, kind: input, shape index: {}]
  %s2 = inlined_call_operand.vmem [shape: f32[8,128], index: 2, kind: output, shape index: {}]
  %s3 = sld [smem:[#allocation0]]
  $region22: #{forward.1} parent=0
    _
  %s5 = ssub.s32 1, %s3
  %s6 = scalar_select 0, %s5, %s3
  $region1: #{forward.1} parent=0
    #allocation2 [shape = 'u8[266240]{0}', space=vmem, size = 0x41000, scoped, tag = 'input window, operand 1, single buffered']
    #allocation3 [shape = 's32[1]{0}', space=sflag, size = 0x4, scoped, tag = 'scoped memory for forward.1']
    %7 = vsyncpa [#allocation3], 0
    // Predicated region
    $region2: #{forward.1} parent=1 // pred_check
      _
    $region3: #{forward.1} parent=1 // pred_check_branch
      %9 = sbr.rel (0) target = $region5
    $region4: #{forward.1} parent=1 // pred_region
      _
    $region5: #{forward.1} parent=1 // pred_fallthru
      _
    // Predicated region
    $region6: #{forward.1} parent=1 // pred_check
      _
    $region7: #{forward.1} parent=1 // pred_check_branch
      %11 = sbr.rel (0) target = $region9
    $region8: #{forward.1} parent=1 // pred_region
      %s13 = ssub.s32 8320, 8320
      %14 = vsyncadd [#allocation3], %s13
      %s15 = sshll.u32 [#allocation2], 4
      %s16 = int_to_ptr.vmem [resolvable:$true] %s15
      %21 = dma.hbm_to_vmem [thread:$0]  %s1, 8320, %s16, [#allocation3], 128, 128, 8
    $region9: #{forward.1} parent=1 // pred_fallthru
      _
    // Predicated region
    $region10: #{forward.1} parent=1 // pred_check
      _
    $region11: #{forward.1} parent=1 // pred_check_branch
      %23 = sbr.rel (0) target = $region13
    $region12: #{forward.1} parent=1 // pred_region
      %24 = dma.done [#allocation3], 8320
    $region13: #{forward.1} parent=1 // pred_fallthru
      _
    %v25 = vld [vmem:[#allocation2 + $0x200] sm:$0xff]
    %v26 = vld [vmem:[%s0] sm:$0xff]
    %v27 = vld [vmem:[#allocation2] sm:$0xff]
    %v28 = vld [vmem:[#allocation2 + $0x8] sm:$0xff]
    %v29 = vld [vmem:[#allocation2 + $0x10] sm:$0xff]
    %v30 = vld [vmem:[#allocation2 + $0x18] sm:$0xff]
    %v31 = vld [vmem:[#allocation2 + $0x20] sm:$0xff]
    %v32 = vld [vmem:[#allocation2 + $0x28] sm:$0xff]
    %v33 = vld [vmem:[#allocation2 + $0x30] sm:$0xff]
    %v34 = vld [vmem:[#allocation2 + $0x38] sm:$0xff]
    %v35 = vld [vmem:[#allocation2 + $0x40] sm:$0xff]
    %v36 = vld [vmem:[#allocation2 + $0x48] sm:$0xff]
    %v37 = vld [vmem:[#allocation2 + $0x50] sm:$0xff]
    %v38 = vld [vmem:[#allocation2 + $0x58] sm:$0xff]
    %v39 = vld [vmem:[#allocation2 + $0x60] sm:$0xff]
    %v40 = vld [vmem:[#allocation2 + $0x68] sm:$0xff]
    %v41 = vld [vmem:[#allocation2 + $0x70] sm:$0xff]
    %v42 = vld [vmem:[#allocation2 + $0x78] sm:$0xff]
    %v43 = vlaneseq
    %v44 = vshrl.u32 %v43, 7
    %v45 = vsub.s32 0, %v44
    %v46 = vrot.slane %v25, %v45
    %47 = vmatprep.subr.mxu0 0.0
    %48 = vmatpush1.msra.mxu0 %v27
    %49 = vmatprep.subr.mxu0 0.0
    %50 = vmatpush1.msra.mxu0 %v28
    %51 = vmatprep.subr.mxu0 0.0
    %52 = vmatpush1.msra.mxu0 %v29
    %53 = vmatprep.subr.mxu0 0.0
    %54 = vmatpush1.msra.mxu0 %v30
    %55 = vmatprep.subr.mxu0 0.0
    %56 = vmatpush1.msra.mxu0 %v31
    %57 = vmatprep.subr.mxu0 0.0
    %58 = vmatpush1.msra.mxu0 %v32
    %59 = vmatprep.subr.mxu0 0.0
    %60 = vmatpush1.msra.mxu0 %v33
    %61 = vmatprep.subr.mxu0 0.0
    %62 = vmatpush1.msra.mxu0 %v34
    %63 = vmatprep.subr.mxu0 0.0
    %64 = vmatpush1.msra.mxu0 %v35
    %65 = vmatprep.subr.mxu0 0.0
    %66 = vmatpush1.msra.mxu0 %v36
    %67 = vmatprep.subr.mxu0 0.0
    %68 = vmatpush1.msra.mxu0 %v37
    %69 = vmatprep.subr.mxu0 0.0
    %70 = vmatpush1.msra.mxu0 %v38
    %71 = vmatprep.subr.mxu0 0.0
    %72 = vmatpush1.msra.mxu0 %v39
    %73 = vmatprep.subr.mxu0 0.0
    %74 = vmatpush1.msra.mxu0 %v40
    %75 = vmatprep.subr.mxu0 0.0
    %76 = vmatpush1.msra.mxu0 %v41
    %77 = vmatprep.subr.mxu0 0.0
    %78 = vmatpush1.msra.mxu0 %v42
    %79 = vmatprep.subr.mxu0 0.0
    %80 = vmatpush1.msra.mxu0 0.0
    %81 = vmatprep.subr.mxu0 0.0
    %82 = vmatpush1.msra.mxu0 0.0
    %83 = vmatprep.subr.mxu0 0.0
    %84 = vmatpush1.msra.mxu0 0.0
    %85 = vmatprep.subr.mxu0 0.0
    %86 = vmatpush1.msra.mxu0 0.0
    %87 = vmatprep.subr.mxu0 0.0
    %88 = vmatpush1.msra.mxu0 0.0
    %89 = vmatprep.subr.mxu0 0.0
    %90 = vmatpush1.msra.mxu0 0.0
    %91 = vmatprep.subr.mxu0 0.0
    %92 = vmatpush1.msra.mxu0 0.0
    %93 = vmatprep.subr.mxu0 0.0
    %94 = vmatpush1.msra.mxu0 0.0
    %95 = vmatprep.subr.mxu0 0.0
    %96 = vmatpush1.msra.mxu0 0.0
    %97 = vmatprep.subr.mxu0 0.0
    %98 = vmatpush1.msra.mxu0 0.0
    %99 = vmatprep.subr.mxu0 0.0
    %100 = vmatpush1.msra.mxu0 0.0
    %101 = vmatprep.subr.mxu0 0.0
    %102 = vmatpush1.msra.mxu0 0.0
    %103 = vmatprep.subr.mxu0 0.0
    %104 = vmatpush1.msra.mxu0 0.0
    %105 = vmatprep.subr.mxu0 0.0
    %106 = vmatpush1.msra.mxu0 0.0
    %107 = vmatprep.subr.mxu0 0.0
    %108 = vmatpush1.msra.mxu0 0.0
    %109 = vmatprep.subr.mxu0 0.0
    %110 = vmatpush1.msra.mxu0 0.0
    %111 = vmatprep.mubr.f32.mxu0 0.0
    %112 = vmatmul.mubr.f32.gmra.mrb[0].mxu0 %v26
    %v113 = vpop.f32.mrb[0].mxu0
    %v114 = vadd.f32 %v46, %v113
    %v115 = vpop.f32.mrb[0].mxu0
    %116 = vdwg.mxu0
    %v117 = vmax.f32 %v114, 0.0
    %v118 = vld [vmem:[#allocation2 + $0x80] sm:$0xff]
    %v119 = vld [vmem:[#allocation2 + $0x88] sm:$0xff]
    %v120 = vld [vmem:[#allocation2 + $0x90] sm:$0xff]
    %v121 = vld [vmem:[#allocation2 + $0x98] sm:$0xff]
    %v122 = vld [vmem:[#allocation2 + $0xa0] sm:$0xff]
    %v123 = vld [vmem:[#allocation2 + $0xa8] sm:$0xff]
    %v124 = vld [vmem:[#allocation2 + $0xb0] sm:$0xff]
    %v125 = vld [vmem:[#allocation2 + $0xb8] sm:$0xff]
    %v126 = vld [vmem:[#allocation2 + $0xc0] sm:$0xff]
    %v127 = vld [vmem:[#allocation2 + $0xc8] sm:$0xff]
    %v128 = vld [vmem:[#allocation2 + $0xd0] sm:$0xff]
    %v129 = vld [vmem:[#allocation2 + $0xd8] sm:$0xff]
    %v130 = vld [vmem:[#allocation2 + $0xe0] sm:$0xff]
    %v131 = vld [vmem:[#allocation2 + $0xe8] sm:$0xff]
    %v132 = vld [vmem:[#allocation2 + $0xf0] sm:$0xff]
    %v133 = vld [vmem:[#allocation2 + $0xf8] sm:$0xff]
    %v134 = vlaneseq
    %v135 = vshrl.u32 %v134, 7
    %v136 = vsub.s32 1, %v135
    %v137 = vrot.slane %v25, %v136
    %138 = vmatprep.subr.mxu0 0.0
    %139 = vmatpush1.msra.mxu0 %v118
    %140 = vmatprep.subr.mxu0 0.0
    %141 = vmatpush1.msra.mxu0 %v119
    %142 = vmatprep.subr.mxu0 0.0
    %143 = vmatpush1.msra.mxu0 %v120
    %144 = vmatprep.subr.mxu0 0.0
    %145 = vmatpush1.msra.mxu0 %v121
    %146 = vmatprep.subr.mxu0 0.0
    %147 = vmatpush1.msra.mxu0 %v122
    %148 = vmatprep.subr.mxu0 0.0
    %149 = vmatpush1.msra.mxu0 %v123
    %150 = vmatprep.subr.mxu0 0.0
    %151 = vmatpush1.msra.mxu0 %v124
    %152 = vmatprep.subr.mxu0 0.0
    %153 = vmatpush1.msra.mxu0 %v125
    %154 = vmatprep.subr.mxu0 0.0
    %155 = vmatpush1.msra.mxu0 %v126
    %156 = vmatprep.subr.mxu0 0.0
    %157 = vmatpush1.msra.mxu0 %v127
    %158 = vmatprep.subr.mxu0 0.0
    %159 = vmatpush1.msra.mxu0 %v128
    %160 = vmatprep.subr.mxu0 0.0
    %161 = vmatpush1.msra.mxu0 %v129
    %162 = vmatprep.subr.mxu0 0.0
    %163 = vmatpush1.msra.mxu0 %v130
    %164 = vmatprep.subr.mxu0 0.0
    %165 = vmatpush1.msra.mxu0 %v131
    %166 = vmatprep.subr.mxu0 0.0
    %167 = vmatpush1.msra.mxu0 %v132
    %168 = vmatprep.subr.mxu0 0.0
    %169 = vmatpush1.msra.mxu0 %v133
    %170 = vmatprep.subr.mxu0 0.0
    %171 = vmatpush1.msra.mxu0 0.0
    %172 = vmatprep.subr.mxu0 0.0
    %173 = vmatpush1.msra.mxu0 0.0
    %174 = vmatprep.subr.mxu0 0.0
    %175 = vmatpush1.msra.mxu0 0.0
    %176 = vmatprep.subr.mxu0 0.0
    %177 = vmatpush1.msra.mxu0 0.0
    %178 = vmatprep.subr.mxu0 0.0
    %179 = vmatpush1.msra.mxu0 0.0
    %180 = vmatprep.subr.mxu0 0.0
    %181 = vmatpush1.msra.mxu0 0.0
    %182 = vmatprep.subr.mxu0 0.0
    %183 = vmatpush1.msra.mxu0 0.0
    %184 = vmatprep.subr.mxu0 0.0
    %185 = vmatpush1.msra.mxu0 0.0
    %186 = vmatprep.subr.mxu0 0.0
    %187 = vmatpush1.msra.mxu0 0.0
    %188 = vmatprep.subr.mxu0 0.0
    %189 = vmatpush1.msra.mxu0 0.0
    %190 = vmatprep.subr.mxu0 0.0
    %191 = vmatpush1.msra.mxu0 0.0
    %192 = vmatprep.subr.mxu0 0.0
    %193 = vmatpush1.msra.mxu0 0.0
    %194 = vmatprep.subr.mxu0 0.0
    %195 = vmatpush1.msra.mxu0 0.0
    %196 = vmatprep.subr.mxu0 0.0
    %197 = vmatpush1.msra.mxu0 0.0
    %198 = vmatprep.subr.mxu0 0.0
    %199 = vmatpush1.msra.mxu0 0.0
    %200 = vmatprep.subr.mxu0 0.0
    %201 = vmatpush1.msra.mxu0 0.0
    %202 = vmatprep.mubr.f32.mxu0 0.0
    %203 = vmatmul.mubr.f32.gmra.mrb[0].mxu0 %v117
    %v204 = vpop.f32.mrb[0].mxu0
    %v205 = vadd.f32 %v137, %v204
    %v206 = vpop.f32.mrb[0].mxu0
    %207 = vdwg.mxu0
    %v208 = vmax.f32 %v205, 0.0
    %v209 = vld [vmem:[#allocation2 + $0x100] sm:$0xff]
    %v210 = vld [vmem:[#allocation2 + $0x108] sm:$0xff]
    %v211 = vld [vmem:[#allocation2 + $0x110] sm:$0xff]
    %v212 = vld [vmem:[#allocation2 + $0x118] sm:$0xff]
    %v213 = vld [vmem:[#allocation2 + $0x120] sm:$0xff]
    %v214 = vld [vmem:[#allocation2 + $0x128] sm:$0xff]
    %v215 = vld [vmem:[#allocation2 + $0x130] sm:$0xff]
    %v216 = vld [vmem:[#allocation2 + $0x138] sm:$0xff]
    %v217 = vld [vmem:[#allocation2 + $0x140] sm:$0xff]
    %v218 = vld [vmem:[#allocation2 + $0x148] sm:$0xff]
    %v219 = vld [vmem:[#allocation2 + $0x150] sm:$0xff]
    %v220 = vld [vmem:[#allocation2 + $0x158] sm:$0xff]
    %v221 = vld [vmem:[#allocation2 + $0x160] sm:$0xff]
    %v222 = vld [vmem:[#allocation2 + $0x168] sm:$0xff]
    %v223 = vld [vmem:[#allocation2 + $0x170] sm:$0xff]
    %v224 = vld [vmem:[#allocation2 + $0x178] sm:$0xff]
    %v225 = vlaneseq
    %v226 = vshrl.u32 %v225, 7
    %v227 = vsub.s32 2, %v226
    %v228 = vrot.slane %v25, %v227
    %229 = vmatprep.subr.mxu0 0.0
    %230 = vmatpush1.msra.mxu0 %v209
    %231 = vmatprep.subr.mxu0 0.0
    %232 = vmatpush1.msra.mxu0 %v210
    %233 = vmatprep.subr.mxu0 0.0
    %234 = vmatpush1.msra.mxu0 %v211
    %235 = vmatprep.subr.mxu0 0.0
    %236 = vmatpush1.msra.mxu0 %v212
    %237 = vmatprep.subr.mxu0 0.0
    %238 = vmatpush1.msra.mxu0 %v213
    %239 = vmatprep.subr.mxu0 0.0
    %240 = vmatpush1.msra.mxu0 %v214
    %241 = vmatprep.subr.mxu0 0.0
    %242 = vmatpush1.msra.mxu0 %v215
    %243 = vmatprep.subr.mxu0 0.0
    %244 = vmatpush1.msra.mxu0 %v216
    %245 = vmatprep.subr.mxu0 0.0
    %246 = vmatpush1.msra.mxu0 %v217
    %247 = vmatprep.subr.mxu0 0.0
    %248 = vmatpush1.msra.mxu0 %v218
    %249 = vmatprep.subr.mxu0 0.0
    %250 = vmatpush1.msra.mxu0 %v219
    %251 = vmatprep.subr.mxu0 0.0
    %252 = vmatpush1.msra.mxu0 %v220
    %253 = vmatprep.subr.mxu0 0.0
    %254 = vmatpush1.msra.mxu0 %v221
    %255 = vmatprep.subr.mxu0 0.0
    %256 = vmatpush1.msra.mxu0 %v222
    %257 = vmatprep.subr.mxu0 0.0
    %258 = vmatpush1.msra.mxu0 %v223
    %259 = vmatprep.subr.mxu0 0.0
    %260 = vmatpush1.msra.mxu0 %v224
    %261 = vmatprep.subr.mxu0 0.0
    %262 = vmatpush1.msra.mxu0 0.0
    %263 = vmatprep.subr.mxu0 0.0
    %264 = vmatpush1.msra.mxu0 0.0
    %265 = vmatprep.subr.mxu0 0.0
    %266 = vmatpush1.msra.mxu0 0.0
    %267 = vmatprep.subr.mxu0 0.0
    %268 = vmatpush1.msra.mxu0 0.0
    %269 = vmatprep.subr.mxu0 0.0
    %270 = vmatpush1.msra.mxu0 0.0
    %271 = vmatprep.subr.mxu0 0.0
    %272 = vmatpush1.msra.mxu0 0.0
    %273 = vmatprep.subr.mxu0 0.0
    %274 = vmatpush1.msra.mxu0 0.0
    %275 = vmatprep.subr.mxu0 0.0
    %276 = vmatpush1.msra.mxu0 0.0
    %277 = vmatprep.subr.mxu0 0.0
    %278 = vmatpush1.msra.mxu0 0.0
    %279 = vmatprep.subr.mxu0 0.0
    %280 = vmatpush1.msra.mxu0 0.0
    %281 = vmatprep.subr.mxu0 0.0
    %282 = vmatpush1.msra.mxu0 0.0
    %283 = vmatprep.subr.mxu0 0.0
    %284 = vmatpush1.msra.mxu0 0.0
    %285 = vmatprep.subr.mxu0 0.0
    %286 = vmatpush1.msra.mxu0 0.0
    %287 = vmatprep.subr.mxu0 0.0
    %288 = vmatpush1.msra.mxu0 0.0
    %289 = vmatprep.subr.mxu0 0.0
    %290 = vmatpush1.msra.mxu0 0.0
    %291 = vmatprep.subr.mxu0 0.0
    %292 = vmatpush1.msra.mxu0 0.0
    %293 = vmatprep.mubr.f32.mxu0 0.0
    %294 = vmatmul.mubr.f32.gmra.mrb[0].mxu0 %v208
    %v295 = vpop.f32.mrb[0].mxu0
    %v296 = vadd.f32 %v228, %v295
    %v297 = vpop.f32.mrb[0].mxu0
    %298 = vdwg.mxu0
    %v299 = vmax.f32 %v296, 0.0
    %v300 = vlaneseq
    %v301 = vshrl.u32 %v300, 7
    %vm302 = vcmp.lt.s32.totalorder %v301, 8
    %v303 = vsel %vm302, %v299, 0.0
    %v304 = vrot.slane %v303, 4
    %v305 = vadd.f32 %v303, %v304
    %v306 = vrot.slane %v305, 2
    %v307 = vadd.f32 %v305, %v306
    %v308 = vrot.slane %v307, 1
    %v309 = vadd.f32 %v307, %v308
    %v310 = vrcp.pop 8.0
    %v311 = vmul.f32 %v309, %v310
    %v312 = vsub.f32 %v299, %v311
    %v313 = vsel %vm302, %v312, 0.0
    %v314 = vmul.f32 %v313, %v313
    %v315 = vrot.slane %v314, 4
    %v316 = vadd.f32 %v314, %v315
    %v317 = vrot.slane %v316, 2
    %v318 = vadd.f32 %v316, %v317
    %v319 = vrot.slane %v318, 1
    %v320 = vadd.f32 %v318, %v319
    %v321 = vmul.f32 %v320, %v310
    %v322 = vlaneseq
    %v323 = vand.u32 %v322, 127
    %v324 = vadd.f32 %v321, 1e-05
    %v325 = vrsqrt.pop %v324
    %v326 = vmul.f32 %v312, %v325
    %v327 = vlaneseq
    %v328 = vshrl.u32 %v327, 7
    %v329 = vsub.s32 3, %v328
    %v330 = vrot.slane %v25, %v329
    %v331 = vmul.f32 %v326, %v330
    %v332 = vlaneseq
    %v333 = vshrl.u32 %v332, 7
    %v334 = vsub.s32 4, %v333
    %v335 = vrot.slane %v25, %v334
    %v336 = vadd.f32 %v331, %v335
    %vm337 = vcmp.ge.s32.totalorder %v323, 32
    %v338 = vsel %vm337, %v336, %v299
    %v339 = vld [vmem:[#allocation2 + $0x180] sm:$0xff]
    %v340 = vld [vmem:[#allocation2 + $0x188] sm:$0xff]
    %v341 = vld [vmem:[#allocation2 + $0x190] sm:$0xff]
    %v342 = vld [vmem:[#allocation2 + $0x198] sm:$0xff]
    %v343 = vld [vmem:[#allocation2 + $0x1a0] sm:$0xff]
    %v344 = vld [vmem:[#allocation2 + $0x1a8] sm:$0xff]
    %v345 = vld [vmem:[#allocation2 + $0x1b0] sm:$0xff]
    %v346 = vld [vmem:[#allocation2 + $0x1b8] sm:$0xff]
    %v347 = vld [vmem:[#allocation2 + $0x1c0] sm:$0xff]
    %v348 = vld [vmem:[#allocation2 + $0x1c8] sm:$0xff]
    %v349 = vld [vmem:[#allocation2 + $0x1d0] sm:$0xff]
    %v350 = vld [vmem:[#allocation2 + $0x1d8] sm:$0xff]
    %v351 = vld [vmem:[#allocation2 + $0x1e0] sm:$0xff]
    %v352 = vld [vmem:[#allocation2 + $0x1e8] sm:$0xff]
    %v353 = vld [vmem:[#allocation2 + $0x1f0] sm:$0xff]
    %v354 = vld [vmem:[#allocation2 + $0x1f8] sm:$0xff]
    %v355 = vlaneseq
    %v356 = vshrl.u32 %v355, 7
    %v357 = vsub.s32 5, %v356
    %v358 = vrot.slane %v25, %v357
    %359 = vmatprep.subr.mxu0 0.0
    %360 = vmatpush1.msra.mxu0 %v339
    %361 = vmatprep.subr.mxu0 0.0
    %362 = vmatpush1.msra.mxu0 %v340
    %363 = vmatprep.subr.mxu0 0.0
    %364 = vmatpush1.msra.mxu0 %v341
    %365 = vmatprep.subr.mxu0 0.0
    %366 = vmatpush1.msra.mxu0 %v342
    %367 = vmatprep.subr.mxu0 0.0
    %368 = vmatpush1.msra.mxu0 %v343
    %369 = vmatprep.subr.mxu0 0.0
    %370 = vmatpush1.msra.mxu0 %v344
    %371 = vmatprep.subr.mxu0 0.0
    %372 = vmatpush1.msra.mxu0 %v345
    %373 = vmatprep.subr.mxu0 0.0
    %374 = vmatpush1.msra.mxu0 %v346
    %375 = vmatprep.subr.mxu0 0.0
    %376 = vmatpush1.msra.mxu0 %v347
    %377 = vmatprep.subr.mxu0 0.0
    %378 = vmatpush1.msra.mxu0 %v348
    %379 = vmatprep.subr.mxu0 0.0
    %380 = vmatpush1.msra.mxu0 %v349
    %381 = vmatprep.subr.mxu0 0.0
    %382 = vmatpush1.msra.mxu0 %v350
    %383 = vmatprep.subr.mxu0 0.0
    %384 = vmatpush1.msra.mxu0 %v351
    %385 = vmatprep.subr.mxu0 0.0
    %386 = vmatpush1.msra.mxu0 %v352
    %387 = vmatprep.subr.mxu0 0.0
    %388 = vmatpush1.msra.mxu0 %v353
    %389 = vmatprep.subr.mxu0 0.0
    %390 = vmatpush1.msra.mxu0 %v354
    %391 = vmatprep.subr.mxu0 0.0
    %392 = vmatpush1.msra.mxu0 0.0
    %393 = vmatprep.subr.mxu0 0.0
    %394 = vmatpush1.msra.mxu0 0.0
    %395 = vmatprep.subr.mxu0 0.0
    %396 = vmatpush1.msra.mxu0 0.0
    %397 = vmatprep.subr.mxu0 0.0
    %398 = vmatpush1.msra.mxu0 0.0
    %399 = vmatprep.subr.mxu0 0.0
    %400 = vmatpush1.msra.mxu0 0.0
    %401 = vmatprep.subr.mxu0 0.0
    %402 = vmatpush1.msra.mxu0 0.0
    %403 = vmatprep.subr.mxu0 0.0
    %404 = vmatpush1.msra.mxu0 0.0
    %405 = vmatprep.subr.mxu0 0.0
    %406 = vmatpush1.msra.mxu0 0.0
    %407 = vmatprep.subr.mxu0 0.0
    %408 = vmatpush1.msra.mxu0 0.0
    %409 = vmatprep.subr.mxu0 0.0
    %410 = vmatpush1.msra.mxu0 0.0
    %411 = vmatprep.subr.mxu0 0.0
    %412 = vmatpush1.msra.mxu0 0.0
    %413 = vmatprep.subr.mxu0 0.0
    %414 = vmatpush1.msra.mxu0 0.0
    %415 = vmatprep.subr.mxu0 0.0
    %416 = vmatpush1.msra.mxu0 0.0
    %417 = vmatprep.subr.mxu0 0.0
    %418 = vmatpush1.msra.mxu0 0.0
    %419 = vmatprep.subr.mxu0 0.0
    %420 = vmatpush1.msra.mxu0 0.0
    %421 = vmatprep.subr.mxu0 0.0
    %422 = vmatpush1.msra.mxu0 0.0
    %423 = vmatprep.mubr.f32.mxu0 0.0
    %424 = vmatmul.mubr.f32.gmra.mrb[0].mxu0 %v338
    %v425 = vpop.f32.mrb[0].mxu0
    %v426 = vadd.f32 %v358, %v425
    %v427 = vpop.f32.mrb[0].mxu0
    %428 = vdwg.mxu0
    %v429 = vand.u32 2147483647, %v426
    %v430 = vsub.f32 0.0, %v429
    %v431 = vmul.f32 %v430, 1.442695
    %v432 = vpow.pop %v431
    %vm433 = vcmp.ge.f32.partialorder %v426, 0.0
    %v434 = vsel %vm433, 1.0, %v432
    %v435 = vadd.f32 %v432, 1.0
    %v436 = vrcp.pop %v435
    %v437 = vmul.f32 %v434, %v436
    %438 = vst [vmem:[%s2] sm:$0xff] %v437
    // Predicated region
    $region14: #{forward.1} parent=1 // pred_check
      _
    $region15: #{forward.1} parent=1 // pred_check_branch
      %440 = sbr.rel (0) target = $region17
    $region16: #{forward.1} parent=1 // pred_region
      _
    $region17: #{forward.1} parent=1 // pred_fallthru
      _
    // Predicated region
    $region18: #{forward.1} parent=1 // pred_check
      _
    $region19: #{forward.1} parent=1 // pred_check_branch
      %442 = sbr.rel (0) target = $region21
    $region20: #{forward.1} parent=1 // pred_region
      _
    $region21: #{forward.1} parent=1 // pred_fallthru
      _
    %443 = vsyncpa [#allocation3], 1

</llo_original>
